<compile_context>
chip_gen: v5e
topology: v5e:2x2
jax: 0.10.0
libtpu: 0.0.40
codegen_flags: <defaults>
</compile_context>

<pallas_src>
import jax
import jax.numpy as jnp
from jax.experimental import pallas as pl
from jax.experimental.pallas import tpu as pltpu


# ---------------------------------------------------------------------------
# Kernel: one batch tile, all heads fused, feature-major layout.
# ---------------------------------------------------------------------------
def classicnet_kernel(x_ref, w1_ref, b1_ref, w2_ref, b2_ref, w3_ref, b3_ref, o_ref):
    # x_ref : (in_dim, tB)            bf16
    # w1_ref: (OH, in_dim)            bf16   (OH = out_dim * hidden, head-major rows)
    # b1_ref: (OH, 1)                 f32
    # w2_ref: (OH, OH)  block-diag    bf16
    # b2_ref: (OH, 1)                 f32
    # w3_ref: (out_dim, OH) block-diag bf16
    # b3_ref: (out_dim, 1)            f32
    # o_ref : (out_dim, tB)           f32    -- lane-dense output tile
    x = x_ref[...]

    h1 = jnp.dot(w1_ref[...], x, preferred_element_type=jnp.float32) + b1_ref[...]
    h1 = jnp.maximum(h1, 0.0)                                           # ReLU, (OH, tB)

    h2 = jnp.dot(w2_ref[...], h1.astype(w2_ref.dtype),
                 preferred_element_type=jnp.float32) + b2_ref[...]
    h2 = jnp.maximum(h2, 0.0)                                           # ReLU, (OH, tB)

    y = jnp.dot(w3_ref[...], h2.astype(w3_ref.dtype),
                preferred_element_type=jnp.float32) + b3_ref[...]       # (out_dim, tB)
    o_ref[...] = y.astype(o_ref.dtype)


# ---------------------------------------------------------------------------
# One-time weight fusion (hoisted out of the forward path).
# ---------------------------------------------------------------------------
def _block_diag(mats):
    """(n, r, c) -> (n*r, n*c) block-diagonal matrix."""
    n, r, c = mats.shape
    out = jnp.zeros((n * r, n * c), mats.dtype)
    for i in range(n):  # n is small and static
        out = out.at[i * r:(i + 1) * r, i * c:(i + 1) * c].set(mats[i])
    return out


def fuse_params(params, compute_dtype=jnp.bfloat16):
    """Build feature-major fused (concatenated / block-diagonal) weights, once."""
    w1, b1, w2, b2, w3, b3 = params
    out_dim, in_dim, hidden = w1.shape
    OH = out_dim * hidden

    # Layer 1: rows are head-major (head*hidden + j):  h1 = W1t @ x
    w1t = jnp.transpose(w1, (0, 2, 1)).reshape(OH, in_dim)
    b1t = b1.reshape(OH, 1).astype(jnp.float32)
    # Layer 2: block-diagonal of per-head transposed weights.
    w2t = _block_diag(jnp.transpose(w2, (0, 2, 1)))                     # (OH, OH)
    b2t = b2.reshape(OH, 1).astype(jnp.float32)
    # Layer 3: block-structured, one row per head.
    w3t = _block_diag(jnp.transpose(w3, (0, 2, 1)))                     # (out_dim, OH)
    b3t = b3.reshape(out_dim, 1).astype(jnp.float32)

    return (w1t.astype(compute_dtype), b1t,
            w2t.astype(compute_dtype), b2t,
            w3t.astype(compute_dtype), b3t)


# ---------------------------------------------------------------------------
# Forward wrapper: tile over B (feature-major), launch the kernel.
# ---------------------------------------------------------------------------
def classicnet_forward(x, fused):
    """x: any shape reshapeable to (-1, in_dim); returns (B, out_dim) float32."""
    w1t, b1t, w2t, b2t, w3t, b3t = fused
    OH, in_dim = w1t.shape
    out_dim = w3t.shape[0]
    cdt = w1t.dtype

    x2 = x.reshape(-1, in_dim)
    B = x2.shape[0]
    if B == 0:                                                          # empty-input guard
        return jnp.zeros((0, out_dim), jnp.float32)

    # --- batch tiling (lane-dense: tile_B is a multiple of 128) -------------------------
    LANE = 128
    TARGET_TILE = 4096                     # per-tile VMEM at 4096 is only a few MiB
    B_pad0 = ((B + LANE - 1) // LANE) * LANE
    if B_pad0 >= 2 * LANE:
        # Ensure >= 2 grid tiles so the "parallel" axis can shard across v7x's 2 TCs.
        half = max(LANE, (B_pad0 // (2 * LANE)) * LANE)
        tile_B = min(TARGET_TILE, half)
    else:
        tile_B = B_pad0
    B_pad = pl.cdiv(B_pad0, tile_B) * tile_B
    n_tiles = B_pad // tile_B

    # Feature-major input (in_dim, B_pad); zero-padded columns are trimmed at the end.
    x_t = jnp.pad(x2.astype(cdt).T, ((0, 0), (0, B_pad - B)))

    # --- explicit VMEM budget (keeps the tile choice safe on v7x's 64 MiB VMEM) ---------
    wbytes = jnp.dtype(cdt).itemsize
    vmem_est = (
        2 * (in_dim * tile_B * wbytes)                 # x block, double-buffered
        + 2 * (out_dim * tile_B * 4)                   # out block, double-buffered
        + 2 * (OH * in_dim + OH * OH + out_dim * OH) * wbytes   # weights
        + 2 * (2 * OH + out_dim) * 4                   # biases
        + 2 * OH * tile_B * 4                          # h1 / h2 intermediates (f32)
    )
    vmem_limit = int(min(max(2 * vmem_est, 16 * 1024 * 1024), 48 * 1024 * 1024))

    out_t = pl.pallas_call(
        classicnet_kernel,
        out_shape=jax.ShapeDtypeStruct((out_dim, B_pad), jnp.float32),
        grid_spec=pltpu.PrefetchScalarGridSpec(
            num_scalar_prefetch=0,
            grid=(n_tiles,),
            in_specs=[
                pl.BlockSpec((in_dim, tile_B), lambda i: (0, i)),       # x tile (lane-dense)
                pl.BlockSpec((OH, in_dim), lambda i: (0, 0)),           # W1 fused (resident)
                pl.BlockSpec((OH, 1), lambda i: (0, 0)),                # b1
                pl.BlockSpec((OH, OH), lambda i: (0, 0)),               # W2 block-diag
                pl.BlockSpec((OH, 1), lambda i: (0, 0)),                # b2
                pl.BlockSpec((out_dim, OH), lambda i: (0, 0)),          # W3 block-diag
                pl.BlockSpec((out_dim, 1), lambda i: (0, 0)),           # b3
            ],
            out_specs=pl.BlockSpec((out_dim, tile_B), lambda i: (0, i)),
        ),
        compiler_params=pltpu.CompilerParams(
            dimension_semantics=("parallel",),          # B-tile axis shards across TCs
            vmem_limit_bytes=vmem_limit),
    )(x_t, w1t, b1t, w2t, b2t, w3t, b3t)

    return out_t[:, :B].T                                               # (B, out_dim), trims pad


# ---------------------------------------------------------------------------
# Params + pure-JAX reference (mirrors the PyTorch module, f32).
# ---------------------------------------------------------------------------
def init_params(key, in_dim, out_dim, hidden_dim):
    """Deterministic init mirroring nn.Linear's uniform(-1/sqrt(fan_in), 1/sqrt(fan_in))."""
    ks = jax.random.split(key, 6)

    def unif(k, shape, fan_in):
        bound = 1.0 / jnp.sqrt(jnp.float32(fan_in))
        return jax.random.uniform(k, shape, jnp.float32, -bound, bound)

    w1 = unif(ks[0], (out_dim, in_dim, hidden_dim), in_dim)
    b1 = unif(ks[1], (out_dim, 1, hidden_dim), in_dim)
    w2 = unif(ks[2], (out_dim, hidden_dim, hidden_dim), hidden_dim)
    b2 = unif(ks[3], (out_dim, 1, hidden_dim), hidden_dim)
    w3 = unif(ks[4], (out_dim, hidden_dim, 1), hidden_dim)
    b3 = unif(ks[5], (out_dim, 1, 1), hidden_dim)
    return (w1, b1, w2, b2, w3, b3)


def classicnet_reference(x, params):
    """Pure-JAX f32 reference of the PyTorch forward (per-head MLPs, hstacked)."""
    w1, b1, w2, b2, w3, b3 = params
    in_dim = w1.shape[1]
    x2 = x.reshape(-1, in_dim)
    cols = []
    for i in range(w1.shape[0]):
        h1 = jnp.maximum(x2 @ w1[i] + b1[i], 0.0)
        h2 = jnp.maximum(h1 @ w2[i] + b2[i], 0.0)
        cols.append(h2 @ w3[i] + b3[i])                                 # (B, 1)
    return jnp.concatenate(cols, axis=1)                                # (B, out_dim)


if __name__ == "__main__":
    in_dim, out_dim, hidden_dim = 8, 4, 16

    key = jax.random.PRNGKey(0)
    k_x, k_x2, k_p = jax.random.split(key, 3)

    params = init_params(k_p, in_dim, out_dim, hidden_dim)
    fused = fuse_params(params)                      # hoisted: built once, reused per call
    fwd = jax.jit(lambda xx: classicnet_forward(xx, fused))

    # Small test: x (2, 2, 8) -> viewed as (-1, in_dim) = (4, 8).
    x = jax.random.normal(k_x, (2, 2, in_dim), jnp.float32)
    y = jax.block_until_ready(fwd(x))
    y_ref = classicnet_reference(x, params)
    assert y.shape == (4, out_dim), y.shape
    # bf16 MXU operands with f32 accumulation -> loosened tolerance vs. the f32 reference.
    assert jnp.allclose(y, y_ref, atol=5e-2, rtol=5e-2), "mismatch vs reference (small)"

    # Multi-tile test: exercises batch padding/trimming and the >=2-tile parallel grid.
    xb = jax.random.normal(k_x2, (300, in_dim), jnp.float32)
    yb = jax.block_until_ready(fwd(xb))
    yb_ref = classicnet_reference(xb, params)
    assert yb.shape == (300, out_dim), yb.shape
    assert jnp.allclose(yb, yb_ref, atol=5e-2, rtol=5e-2), "mismatch vs reference (tiled)"

    print("KERNEL_OK")
</pallas_src>

<mosaic_0001>
module attributes {stable_mosaic.version = 11 : i64} {
  func.func @classicnet_kernel(%arg0: i32, %arg1: memref<8x128xbf16, #tpu.memory_space<vmem>>, %arg2: memref<64x8xbf16, #tpu.memory_space<vmem>>, %arg3: memref<64x1xf32, #tpu.memory_space<vmem>>, %arg4: memref<64x64xbf16, #tpu.memory_space<vmem>>, %arg5: memref<64x1xf32, #tpu.memory_space<vmem>>, %arg6: memref<4x64xbf16, #tpu.memory_space<vmem>>, %arg7: memref<4x1xf32, #tpu.memory_space<vmem>>, %arg8: memref<4x128xf32, #tpu.memory_space<vmem>>) attributes {dimension_semantics = [#tpu.dimension_semantics<parallel>], iteration_bounds = array<i64: 1>, scalar_prefetch = 0 : i64, scratch_operands = 0 : i64, tpu.core_type = #tpu.core_type<tc>, window_params = [{transform_indices = @transform_0, window_bounds = array<i64: 8, 128>}, {pipeline_mode = #tpu.pipeline_mode<synchronous>, transform_indices = @transform_1, window_bounds = array<i64: 64, 8>}, {pipeline_mode = #tpu.pipeline_mode<synchronous>, transform_indices = @transform_2, window_bounds = array<i64: 64, 1>}, {pipeline_mode = #tpu.pipeline_mode<synchronous>, transform_indices = @transform_3, window_bounds = array<i64: 64, 64>}, {pipeline_mode = #tpu.pipeline_mode<synchronous>, transform_indices = @transform_4, window_bounds = array<i64: 64, 1>}, {pipeline_mode = #tpu.pipeline_mode<synchronous>, transform_indices = @transform_5, window_bounds = array<i64: 4, 64>}, {pipeline_mode = #tpu.pipeline_mode<synchronous>, transform_indices = @transform_6, window_bounds = array<i64: 4, 1>}, {transform_indices = @transform_7, window_bounds = array<i64: 4, 128>}]} {
    %c0 = arith.constant 0 : index
    %c0_0 = arith.constant 0 : index
    %0 = vector.load %arg1[%c0, %c0_0] : memref<8x128xbf16, #tpu.memory_space<vmem>>, vector<8x128xbf16>
    %c0_1 = arith.constant 0 : index
    %c0_2 = arith.constant 0 : index
    %1 = vector.load %arg2[%c0_1, %c0_2] : memref<64x8xbf16, #tpu.memory_space<vmem>>, vector<64x8xbf16>
    %cst = arith.constant dense<0.000000e+00> : vector<64x128xf32>
    %2 = tpu.matmul %1, %0, %cst {dimension_numbers = #tpu.dot_dimension_numbers<[1], [0], [0], [1], [0, 0, 1, 1], [], []>} : vector<64x8xbf16>, vector<8x128xbf16>, vector<64x128xf32> -> vector<64x128xf32>
    %c0_3 = arith.constant 0 : index
    %c0_4 = arith.constant 0 : index
    %3 = vector.load %arg3[%c0_3, %c0_4] : memref<64x1xf32, #tpu.memory_space<vmem>>, vector<64x1xf32>
    %4 = vector.broadcast %3 : vector<64x1xf32> to vector<64x128xf32>
    %5 = arith.addf %2, %4 : vector<64x128xf32>
    %cst_5 = arith.constant 0.000000e+00 : f32
    %6 = vector.broadcast %cst_5 : f32 to vector<64x128xf32>
    %7 = arith.maximumf %5, %6 : vector<64x128xf32>
    %c0_6 = arith.constant 0 : index
    %c0_7 = arith.constant 0 : index
    %8 = vector.load %arg4[%c0_6, %c0_7] : memref<64x64xbf16, #tpu.memory_space<vmem>>, vector<64x64xbf16>
    %9 = arith.truncf %7 : vector<64x128xf32> to vector<64x128xbf16>
    %cst_8 = arith.constant dense<0.000000e+00> : vector<64x128xf32>
    %10 = tpu.matmul %8, %9, %cst_8 {dimension_numbers = #tpu.dot_dimension_numbers<[1], [0], [0], [1], [0, 0, 1, 1], [], []>} : vector<64x64xbf16>, vector<64x128xbf16>, vector<64x128xf32> -> vector<64x128xf32>
    %c0_9 = arith.constant 0 : index
    %c0_10 = arith.constant 0 : index
    %11 = vector.load %arg5[%c0_9, %c0_10] : memref<64x1xf32, #tpu.memory_space<vmem>>, vector<64x1xf32>
    %12 = vector.broadcast %11 : vector<64x1xf32> to vector<64x128xf32>
    %13 = arith.addf %10, %12 : vector<64x128xf32>
    %cst_11 = arith.constant 0.000000e+00 : f32
    %14 = vector.broadcast %cst_11 : f32 to vector<64x128xf32>
    %15 = arith.maximumf %13, %14 : vector<64x128xf32>
    %c0_12 = arith.constant 0 : index
    %c0_13 = arith.constant 0 : index
    %16 = vector.load %arg6[%c0_12, %c0_13] : memref<4x64xbf16, #tpu.memory_space<vmem>>, vector<4x64xbf16>
    %17 = arith.truncf %15 : vector<64x128xf32> to vector<64x128xbf16>
    %cst_14 = arith.constant dense<0.000000e+00> : vector<4x128xf32>
    %18 = tpu.matmul %16, %17, %cst_14 {dimension_numbers = #tpu.dot_dimension_numbers<[1], [0], [0], [1], [0, 0, 1, 1], [], []>} : vector<4x64xbf16>, vector<64x128xbf16>, vector<4x128xf32> -> vector<4x128xf32>
    %c0_15 = arith.constant 0 : index
    %c0_16 = arith.constant 0 : index
    %19 = vector.load %arg7[%c0_15, %c0_16] : memref<4x1xf32, #tpu.memory_space<vmem>>, vector<4x1xf32>
    %20 = vector.broadcast %19 : vector<4x1xf32> to vector<4x128xf32>
    %21 = arith.addf %18, %20 : vector<4x128xf32>
    %c0_17 = arith.constant 0 : index
    %c0_18 = arith.constant 0 : index
    %22 = vector.load %arg8[%c0_17, %c0_18] : memref<4x128xf32, #tpu.memory_space<vmem>>, vector<4x128xf32>
    tpu.vector_store %arg8[%c0_17, %c0_18], %21 {strides = array<i32>} : memref<4x128xf32, #tpu.memory_space<vmem>>, vector<4x128xf32>,
    return
  }
  func.func @transform_0(%arg0: i32) -> (i32, i32) {
    %c0_i32 = arith.constant 0 : i32
    %c0_i32_0 = arith.constant 0 : i32
    return %c0_i32, %arg0 : i32, i32
  }
  func.func @transform_1(%arg0: i32) -> (i32, i32) {
    %c0_i32 = arith.constant 0 : i32
    %c0_i32_0 = arith.constant 0 : i32
    %c0_i32_1 = arith.constant 0 : i32
    return %c0_i32, %c0_i32_0 : i32, i32
  }
  func.func @transform_2(%arg0: i32) -> (i32, i32) {
    %c0_i32 = arith.constant 0 : i32
    %c0_i32_0 = arith.constant 0 : i32
    %c0_i32_1 = arith.constant 0 : i32
    return %c0_i32, %c0_i32_0 : i32, i32
  }
  func.func @transform_3(%arg0: i32) -> (i32, i32) {
    %c0_i32 = arith.constant 0 : i32
    %c0_i32_0 = arith.constant 0 : i32
    %c0_i32_1 = arith.constant 0 : i32
    return %c0_i32, %c0_i32_0 : i32, i32
  }
  func.func @transform_4(%arg0: i32) -> (i32, i32) {
    %c0_i32 = arith.constant 0 : i32
    %c0_i32_0 = arith.constant 0 : i32
    %c0_i32_1 = arith.constant 0 : i32
    return %c0_i32, %c0_i32_0 : i32, i32
  }
  func.func @transform_5(%arg0: i32) -> (i32, i32) {
    %c0_i32 = arith.constant 0 : i32
    %c0_i32_0 = arith.constant 0 : i32
    %c0_i32_1 = arith.constant 0 : i32
    return %c0_i32, %c0_i32_0 : i32, i32
  }
  func.func @transform_6(%arg0: i32) -> (i32, i32) {
    %c0_i32 = arith.constant 0 : i32
    %c0_i32_0 = arith.constant 0 : i32
    %c0_i32_1 = arith.constant 0 : i32
    return %c0_i32, %c0_i32_0 : i32, i32
  }
  func.func @transform_7(%arg0: i32) -> (i32, i32) {
    %c0_i32 = arith.constant 0 : i32
    %c0_i32_0 = arith.constant 0 : i32
    return %c0_i32, %arg0 : i32, i32
  }
}

</mosaic_0001>

<llo_original>
// kernel: _lambda_.1
$region0: #{_lambda_.1}
  #allocation0 [shape = 'u32[]', space=smem, size = 0x4, offset = 0x4, fixed_abs, tag = 'smem constant byte address 0x4 - core index']
  #allocation1 [shape = 'u32[72,128]{1,0:T(1,128)}', space=vmem, size = 0x9000, scoped, tag = 'internal scratch']
  %s0 = inlined_call_operand.vmem [shape: bf16[8,128], index: 0, kind: input, shape index: {}]
  %s1 = inlined_call_operand.hbm [shape: bf16[64,8], index: 1, kind: input, shape index: {}]
  %s2 = inlined_call_operand.hbm [shape: f32[64,1], index: 2, kind: input, shape index: {}]
  %s3 = inlined_call_operand.hbm [shape: bf16[64,64], index: 3, kind: input, shape index: {}]
  %s4 = inlined_call_operand.hbm [shape: f32[64,1], index: 4, kind: input, shape index: {}]
  %s5 = inlined_call_operand.vmem [shape: bf16[4,64], index: 5, kind: input, shape index: {}]
  %s6 = inlined_call_operand.vmem [shape: f32[4,1], index: 6, kind: input, shape index: {}]
  %s7 = inlined_call_operand.vmem [shape: f32[4,128], index: 7, kind: output, shape index: {}]
  %s8 = sld [smem:[#allocation0]]
  $region54: #{_lambda_.1} parent=0
    _
  %s10 = ssub.s32 1, %s8
  %s11 = scalar_select 0, %s10, %s8
  $region1: #{_lambda_.1} parent=0
    #allocation2 [shape = 'u8[16384]{0}', space=vmem, size = 0x4000, scoped, tag = 'input window, operand 1, single buffered']
    #allocation3 [shape = 's32[1]{0}', space=sflag, size = 0x4, scoped, tag = 'scoped memory for _lambda_.1']
    #allocation4 [shape = 'u8[32768]{0}', space=vmem, size = 0x8000, scoped, tag = 'input window, operand 2, single buffered']
    #allocation5 [shape = 's32[1]{0}', space=sflag, size = 0x4, scoped, tag = 'scoped memory for _lambda_.1']
    #allocation6 [shape = 'u8[16384]{0}', space=vmem, size = 0x4000, scoped, tag = 'input window, operand 3, single buffered']
    #allocation7 [shape = 'u8[32768]{0}', space=vmem, size = 0x8000, scoped, tag = 'input window, operand 4, single buffered']
    #allocation8 [shape = 's32[1]{0}', space=sflag, size = 0x4, scoped, tag = 'scoped memory for _lambda_.1']
    %12 = vsyncpa [#allocation3], 0
    %13 = vsyncpa [#allocation5], 0
    %14 = vsyncpa [#allocation8], 0
    // Predicated region
    $region2: #{_lambda_.1} parent=1 // pred_check
      _
    $region3: #{_lambda_.1} parent=1 // pred_check_branch
      %16 = sbr.rel (0) target = $region5
    $region4: #{_lambda_.1} parent=1 // pred_region
      _
    $region5: #{_lambda_.1} parent=1 // pred_fallthru
      _
    // Predicated region
    $region6: #{_lambda_.1} parent=1 // pred_check
      _
    $region7: #{_lambda_.1} parent=1 // pred_check_branch
      %18 = sbr.rel (0) target = $region9
    $region8: #{_lambda_.1} parent=1 // pred_region
      %20 = vsyncadd [#allocation3], 0
      %s21 = sshll.u32 %s1, 4
      %s22 = int_to_ptr.hbm [resolvable:$true] %s21
      %s23 = sshll.u32 [#allocation2], 4
      %s24 = int_to_ptr.vmem [resolvable:$true] %s23
      %29 = dma.hbm_to_vmem [thread:$0]  %s22, 512, %s24, [#allocation3], 64, 64, 4
    $region9: #{_lambda_.1} parent=1 // pred_fallthru
      _
    // Predicated region
    $region10: #{_lambda_.1} parent=1 // pred_check
      _
    $region11: #{_lambda_.1} parent=1 // pred_check_branch
      %31 = sbr.rel (0) target = $region13
    $region12: #{_lambda_.1} parent=1 // pred_region
      %33 = vsyncadd [#allocation5], 0
      %s34 = sshll.u32 %s2, 4
      %s35 = int_to_ptr.hbm [resolvable:$true] %s34
      %s36 = sshll.u32 [#allocation4], 4
      %s37 = int_to_ptr.vmem [resolvable:$true] %s36
      %42 = dma.hbm_to_vmem [thread:$0]  %s35, 1024, %s37, [#allocation5], 128, 128, 8
    $region13: #{_lambda_.1} parent=1 // pred_fallthru
      _
    // Predicated region
    $region14: #{_lambda_.1} parent=1 // pred_check
      _
    $region15: #{_lambda_.1} parent=1 // pred_check_branch
      %44 = sbr.rel (0) target = $region17
    $region16: #{_lambda_.1} parent=1 // pred_region
      %46 = vsyncadd [#allocation5], 0
      %s47 = sshll.u32 %s3, 4
      %s48 = int_to_ptr.hbm [resolvable:$true] %s47
      %s49 = sshll.u32 [#allocation6], 4
      %s50 = int_to_ptr.vmem [resolvable:$true] %s49
      %55 = dma.hbm_to_vmem [thread:$0]  %s48, 512, %s50, [#allocation5], 64, 64, 4
    $region17: #{_lambda_.1} parent=1 // pred_fallthru
      _
    // Predicated region
    $region18: #{_lambda_.1} parent=1 // pred_check
      _
    $region19: #{_lambda_.1} parent=1 // pred_check_branch
      %57 = sbr.rel (0) target = $region21
    $region20: #{_lambda_.1} parent=1 // pred_region
      %59 = vsyncadd [#allocation8], 0
      %s60 = sshll.u32 %s4, 4
      %s61 = int_to_ptr.hbm [resolvable:$true] %s60
      %s62 = sshll.u32 [#allocation7], 4
      %s63 = int_to_ptr.vmem [resolvable:$true] %s62
      %68 = dma.hbm_to_vmem [thread:$0]  %s61, 1024, %s63, [#allocation8], 128, 128, 8
    $region21: #{_lambda_.1} parent=1 // pred_fallthru
      _
    // Predicated region
    $region22: #{_lambda_.1} parent=1 // pred_check
      _
    $region23: #{_lambda_.1} parent=1 // pred_check_branch
      %70 = sbr.rel (0) target = $region25
    $region24: #{_lambda_.1} parent=1 // pred_region
      _
    $region25: #{_lambda_.1} parent=1 // pred_fallthru
      _
    // Predicated region
    $region26: #{_lambda_.1} parent=1 // pred_check
      _
    $region27: #{_lambda_.1} parent=1 // pred_check_branch
      %72 = sbr.rel (0) target = $region29
    $region28: #{_lambda_.1} parent=1 // pred_region
      _
    $region29: #{_lambda_.1} parent=1 // pred_fallthru
      _
    // Predicated region
    $region30: #{_lambda_.1} parent=1 // pred_check
      _
    $region31: #{_lambda_.1} parent=1 // pred_check_branch
      %74 = sbr.rel (0) target = $region33
    $region32: #{_lambda_.1} parent=1 // pred_region
      %76 = dma.done [#allocation3], 512
    $region33: #{_lambda_.1} parent=1 // pred_fallthru
      _
    // Predicated region
    $region34: #{_lambda_.1} parent=1 // pred_check
      _
    $region35: #{_lambda_.1} parent=1 // pred_check_branch
      %78 = sbr.rel (0) target = $region37
    $region36: #{_lambda_.1} parent=1 // pred_region
      %80 = dma.done [#allocation5], 1024
    $region37: #{_lambda_.1} parent=1 // pred_fallthru
      _
    // Predicated region
    $region38: #{_lambda_.1} parent=1 // pred_check
      _
    $region39: #{_lambda_.1} parent=1 // pred_check_branch
      %82 = sbr.rel (0) target = $region41
    $region40: #{_lambda_.1} parent=1 // pred_region
      %84 = dma.done [#allocation5], 512
    $region41: #{_lambda_.1} parent=1 // pred_fallthru
      _
    // Predicated region
    $region42: #{_lambda_.1} parent=1 // pred_check
      _
    $region43: #{_lambda_.1} parent=1 // pred_check_branch
      %86 = sbr.rel (0) target = $region45
    $region44: #{_lambda_.1} parent=1 // pred_region
      %88 = dma.done [#allocation8], 1024
    $region45: #{_lambda_.1} parent=1 // pred_fallthru
      _
    %v90 = vld [vmem:[%s0] sm:$0xf]
    %v91 = vld [vmem:[#allocation2] sm:$0xf]
    %v92 = vld [vmem:[#allocation2 + $0x4] sm:$0xf]
    %v93 = vld [vmem:[#allocation2 + $0x8] sm:$0xf]
    %v94 = vld [vmem:[#allocation2 + $0xc] sm:$0xf]
    %v95 = vld [vmem:[#allocation2 + $0x10] sm:$0xf]
    %v96 = vld [vmem:[#allocation2 + $0x14] sm:$0xf]
    %v97 = vld [vmem:[#allocation2 + $0x18] sm:$0xf]
    %v98 = vld [vmem:[#allocation2 + $0x1c] sm:$0xf]
    %v99 = vld [vmem:[#allocation4] sm:$0xff]
    %v100 = vld [vmem:[#allocation4 + $0x8] sm:$0xff]
    %v101 = vld [vmem:[#allocation4 + $0x10] sm:$0xff]
    %v102 = vld [vmem:[#allocation4 + $0x18] sm:$0xff]
    %v103 = vld [vmem:[#allocation4 + $0x20] sm:$0xff]
    %v104 = vld [vmem:[#allocation4 + $0x28] sm:$0xff]
    %v105 = vld [vmem:[#allocation4 + $0x30] sm:$0xff]
    %v106 = vld [vmem:[#allocation4 + $0x38] sm:$0xff]
    %108 = vset.pattern.permute.xlu0 0
    %109 = vperm.xlu0 %108, %v99
    %v110 = vpop.permute.xlu0 %109
    %113 = vset.pattern.permute.xlu0 0
    %114 = vperm.xlu0 %113, %v100
    %v115 = vpop.permute.xlu0 %114
    %118 = vset.pattern.permute.xlu0 0
    %119 = vperm.xlu0 %118, %v101
    %v120 = vpop.permute.xlu0 %119
    %123 = vset.pattern.permute.xlu0 0
    %124 = vperm.xlu0 %123, %v102
    %v125 = vpop.permute.xlu0 %124
    %128 = vset.pattern.permute.xlu0 0
    %129 = vperm.xlu0 %128, %v103
    %v130 = vpop.permute.xlu0 %129
    %133 = vset.pattern.permute.xlu0 0
    %134 = vperm.xlu0 %133, %v104
    %v135 = vpop.permute.xlu0 %134
    %138 = vset.pattern.permute.xlu0 0
    %139 = vperm.xlu0 %138, %v105
    %v140 = vpop.permute.xlu0 %139
    %143 = vset.pattern.permute.xlu0 0
    %144 = vperm.xlu0 %143, %v106
    %v145 = vpop.permute.xlu0 %144
    %v155 = vunpack.c.l.b16 %v91
    %v156 = vunpack.c.l.b16 %v92
    %v157 = vunpack.c.l.b16 %v93
    %v158 = vunpack.c.l.b16 %v94
    %v159 = vunpack.c.l.b16 %v95
    %v160 = vunpack.c.l.b16 %v96
    %v161 = vunpack.c.l.b16 %v97
    %v162 = vunpack.c.l.b16 %v98
    %v163 = vpack.c.b16 %v156, %v155
    %v164 = vpack.c.b16 %v158, %v157
    %v165 = vpack.c.b16 %v160, %v159
    %v166 = vpack.c.b16 %v162, %v161
    %vm167 = vcmask 64512
    %v169 = vsel %vm167, %v163, 0
    %v172 = vsel %vm167, %v164, 0
    %v175 = vsel %vm167, %v165, 0
    %v178 = vsel %vm167, %v166, 0
    %vm180 = vcmask 1043456
    %v182 = vsel %vm180, %v90, 0
    %184 = vmatpush.bf16.msra.mxu0 0
    %185 = vmatpush.bf16.msra.mxu0 0
    %186 = vmatpush.bf16.msra.mxu0 0
    %187 = vmatpush.bf16.msra.mxu0 0
    %188 = vmatpush.bf16.msra.mxu0 0
    %189 = vmatpush.bf16.msra.mxu0 0
    %190 = vmatpush.bf16.msra.mxu0 0
    %191 = vmatpush.bf16.msra.mxu0 %v182
    %192 = vmatmul.bf16.gmra.mxu0 %v169
    %v193 = vpop.f32.mrf.mxu0
    %v194 = vadd.f32 %v110, %v193
    %v195 = vpop.f32.mrf.mxu0
    %v196 = vadd.f32 %v115, %v195
    %197 = vmatmul.bf16.gmra.mxu0 %v172
    %v198 = vpop.f32.mrf.mxu0
    %v199 = vadd.f32 %v120, %v198
    %v200 = vpop.f32.mrf.mxu0
    %v201 = vadd.f32 %v125, %v200
    %202 = vmatmul.bf16.gmra.mxu0 %v175
    %v203 = vpop.f32.mrf.mxu0
    %v204 = vadd.f32 %v130, %v203
    %v205 = vpop.f32.mrf.mxu0
    %v206 = vadd.f32 %v135, %v205
    %207 = vmatmul.bf16.gmra.mxu0 %v178
    %v208 = vpop.f32.mrf.mxu0
    %v209 = vadd.f32 %v140, %v208
    %v210 = vpop.f32.mrf.mxu0
    %v211 = vadd.f32 %v145, %v210
    %212 = vdwg.mxu0
    %v213 = vmax.f32 %v194, 0.0
    %v214 = vmax.f32 %v196, 0.0
    %v215 = vmax.f32 %v199, 0.0
    %v216 = vmax.f32 %v201, 0.0
    %v217 = vmax.f32 %v204, 0.0
    %v218 = vmax.f32 %v206, 0.0
    %v219 = vmax.f32 %v209, 0.0
    %v220 = vmax.f32 %v211, 0.0
    %v221 = vld [vmem:[#allocation6] sm:$0xf]
    %v222 = vld [vmem:[#allocation6 + $0x4] sm:$0xf]
    %v223 = vld [vmem:[#allocation6 + $0x8] sm:$0xf]
    %v224 = vld [vmem:[#allocation6 + $0xc] sm:$0xf]
    %v225 = vld [vmem:[#allocation6 + $0x10] sm:$0xf]
    %v226 = vld [vmem:[#allocation6 + $0x14] sm:$0xf]
    %v227 = vld [vmem:[#allocation6 + $0x18] sm:$0xf]
    %v228 = vld [vmem:[#allocation6 + $0x1c] sm:$0xf]
    %v229 = vpack.c.bf16 %v214, %v213
    %v230 = vpack.c.bf16 %v216, %v215
    %v231 = vpack.c.bf16 %v218, %v217
    %v232 = vpack.c.bf16 %v220, %v219
    %v233 = vld [vmem:[#allocation7] sm:$0xff]
    %v234 = vld [vmem:[#allocation7 + $0x8] sm:$0xff]
    %v235 = vld [vmem:[#allocation7 + $0x10] sm:$0xff]
    %v236 = vld [vmem:[#allocation7 + $0x18] sm:$0xff]
    %v237 = vld [vmem:[#allocation7 + $0x20] sm:$0xff]
    %v238 = vld [vmem:[#allocation7 + $0x28] sm:$0xff]
    %v239 = vld [vmem:[#allocation7 + $0x30] sm:$0xff]
    %v240 = vld [vmem:[#allocation7 + $0x38] sm:$0xff]
    %242 = vset.pattern.permute.xlu0 0
    %243 = vperm.xlu0 %242, %v233
    %v244 = vpop.permute.xlu0 %243
    %247 = vset.pattern.permute.xlu0 0
    %248 = vperm.xlu0 %247, %v234
    %v249 = vpop.permute.xlu0 %248
    %252 = vset.pattern.permute.xlu0 0
    %253 = vperm.xlu0 %252, %v235
    %v254 = vpop.permute.xlu0 %253
    %257 = vset.pattern.permute.xlu0 0
    %258 = vperm.xlu0 %257, %v236
    %v259 = vpop.permute.xlu0 %258
    %262 = vset.pattern.permute.xlu0 0
    %263 = vperm.xlu0 %262, %v237
    %v264 = vpop.permute.xlu0 %263
    %267 = vset.pattern.permute.xlu0 0
    %268 = vperm.xlu0 %267, %v238
    %v269 = vpop.permute.xlu0 %268
    %272 = vset.pattern.permute.xlu0 0
    %273 = vperm.xlu0 %272, %v239
    %v274 = vpop.permute.xlu0 %273
    %277 = vset.pattern.permute.xlu0 0
    %278 = vperm.xlu0 %277, %v240
    %v279 = vpop.permute.xlu0 %278
    %v289 = vunpack.c.l.b16 %v221
    %v290 = vunpack.c.l.b16 %v222
    %v291 = vunpack.c.l.b16 %v223
    %v292 = vunpack.c.l.b16 %v224
    %v293 = vunpack.c.l.b16 %v225
    %v294 = vunpack.c.l.b16 %v226
    %v295 = vunpack.c.l.b16 %v227
    %v296 = vunpack.c.l.b16 %v228
    %v297 = vpack.c.b16 %v290, %v289
    %v298 = vpack.c.b16 %v292, %v291
    %v299 = vpack.c.b16 %v294, %v293
    %v300 = vpack.c.b16 %v296, %v295
    %vm301 = vcmask 523264
    %v303 = vsel %vm301, %v297, 0
    %v306 = vsel %vm301, %v298, 0
    %v309 = vsel %vm301, %v299, 0
    %v312 = vsel %vm301, %v300, 0
    %314 = vmatpush.bf16.msra.mxu0 0
    %315 = vmatpush.bf16.msra.mxu0 0
    %316 = vmatpush.bf16.msra.mxu0 0
    %317 = vmatpush.bf16.msra.mxu0 0
    %318 = vmatpush.bf16.msra.mxu0 %v232
    %319 = vmatpush.bf16.msra.mxu0 %v231
    %320 = vmatpush.bf16.msra.mxu0 %v230
    %321 = vmatpush.bf16.msra.mxu0 %v229
    %322 = vmatmul.bf16.gmra.mxu0 %v303
    %v323 = vpop.f32.mrf.mxu0
    %v324 = vadd.f32 %v244, %v323
    %v325 = vpop.f32.mrf.mxu0
    %v326 = vadd.f32 %v249, %v325
    %327 = vmatmul.bf16.gmra.mxu0 %v306
    %v328 = vpop.f32.mrf.mxu0
    %v329 = vadd.f32 %v254, %v328
    %v330 = vpop.f32.mrf.mxu0
    %v331 = vadd.f32 %v259, %v330
    %332 = vmatmul.bf16.gmra.mxu0 %v309
    %v333 = vpop.f32.mrf.mxu0
    %v334 = vadd.f32 %v264, %v333
    %v335 = vpop.f32.mrf.mxu0
    %v336 = vadd.f32 %v269, %v335
    %337 = vmatmul.bf16.gmra.mxu0 %v312
    %v338 = vpop.f32.mrf.mxu0
    %v339 = vadd.f32 %v274, %v338
    %v340 = vpop.f32.mrf.mxu0
    %v341 = vadd.f32 %v279, %v340
    %342 = vdwg.mxu0
    %v343 = vmax.f32 %v324, 0.0
    %v344 = vmax.f32 %v326, 0.0
    %v345 = vmax.f32 %v329, 0.0
    %v346 = vmax.f32 %v331, 0.0
    %v347 = vmax.f32 %v334, 0.0
    %v348 = vmax.f32 %v336, 0.0
    %v349 = vmax.f32 %v339, 0.0
    %v350 = vmax.f32 %v341, 0.0
    %v351 = vld [vmem:[%s5] sm:$0x3]
    %v352 = vpack.c.bf16 %v344, %v343
    %v353 = vpack.c.bf16 %v346, %v345
    %v354 = vpack.c.bf16 %v348, %v347
    %v355 = vpack.c.bf16 %v350, %v349
    %v356 = vld [vmem:[%s6] sm:$0xf]
    %358 = vset.pattern.permute.xlu0 0
    %359 = vperm.xlu0 %358, %v356
    %v360 = vpop.permute.xlu0 %359
    %v363 = vsel %vm301, %v351, 0
    %365 = vmatpush.bf16.msra.mxu0 0
    %366 = vmatpush.bf16.msra.mxu0 0
    %367 = vmatpush.bf16.msra.mxu0 0
    %368 = vmatpush.bf16.msra.mxu0 0
    %369 = vmatpush.bf16.msra.mxu0 %v355
    %370 = vmatpush.bf16.msra.mxu0 %v354
    %371 = vmatpush.bf16.msra.mxu0 %v353
    %372 = vmatpush.bf16.msra.mxu0 %v352
    %373 = vmatmul.bf16.gmra.mxu0 %v363
    %v374 = vpop.f32.mrf.mxu0
    %v375 = vadd.f32 %v360, %v374
    %v376 = vpop.f32.mrf.mxu0
    %377 = vdwg.mxu0
    %378 = vst [vmem:[%s7] sm:$0xf] %v375
    // Predicated region
    $region46: #{_lambda_.1} parent=1 // pred_check
      _
    $region47: #{_lambda_.1} parent=1 // pred_check_branch
      %380 = sbr.rel (0) target = $region49
    $region48: #{_lambda_.1} parent=1 // pred_region
      _
    $region49: #{_lambda_.1} parent=1 // pred_fallthru
      _
    // Predicated region
    $region50: #{_lambda_.1} parent=1 // pred_check
      _
    $region51: #{_lambda_.1} parent=1 // pred_check_branch
      %382 = sbr.rel (0) target = $region53
    $region52: #{_lambda_.1} parent=1 // pred_region
      _
    $region53: #{_lambda_.1} parent=1 // pred_fallthru
      _
    %383 = vsyncpa [#allocation3], 1
    %384 = vsyncpa [#allocation5], 1
    %385 = vsyncpa [#allocation8], 1

</llo_original>
